<compile_context>
chip_gen: v5e
topology: v5e:2x2
jax: 0.10.0
libtpu: 0.0.40
codegen_flags: <defaults>
</compile_context>

<pallas_src>
import functools

import jax
import jax.numpy as jnp
from jax.experimental import pallas as pl
from jax.experimental.pallas import tpu as pltpu


# ----------------------------------------------------------------------------- fused kernel
def dsm_local_attention_kernel(x_ref, a_ref, b_ref, o_ref):
    x = x_ref[0]                                          # (C, HW)  lane-dense
    mean = jnp.mean(x, axis=-1, keepdims=True)            # (C, 1)   spatial mean per channel
    out = x - mean                                        # centered activation
    a = a_ref[...]                                        # (C, 1)   per-channel params
    b = b_ref[...]
    o_ref[0] = a * out * x + b * x                        # a*out*x + b*x (matches reference)


# ----------------------------------------------------------------------------- wrapper
def dsm_local_attention(x_nchw, a, b):
    """x_nchw: (B, C, H, W) float32; a, b: (C, 1, 1) float32. Returns (B, C, H, W)."""
    B, C, H, W = x_nchw.shape
    HW = H * W

    # NCHW is already (B, C, H*W)-contiguous -> pure reshape, no transpose / copy.
    x = x_nchw.reshape(B, C, HW).astype(jnp.float32)
    a2 = a.reshape(C, 1).astype(jnp.float32)
    b2 = b.reshape(C, 1).astype(jnp.float32)

    y = pl.pallas_call(
        dsm_local_attention_kernel,
        out_shape=jax.ShapeDtypeStruct((B, C, HW), jnp.float32),
        grid=(B,),
        in_specs=[
            pl.BlockSpec((1, C, HW), lambda i: (i, 0, 0)),   # one batch image per grid step
            pl.BlockSpec((C, 1), lambda i: (0, 0)),          # a (broadcast along lanes in-kernel)
            pl.BlockSpec((C, 1), lambda i: (0, 0)),          # b
        ],
        out_specs=pl.BlockSpec((1, C, HW), lambda i: (i, 0, 0)),
        compiler_params=pltpu.CompilerParams(
            dimension_semantics=("parallel",),               # batch axis shardable across cores
        ),
    )(x, a2, b2)

    return y.reshape(B, C, H, W)


# ----------------------------------------------------------------------------- reference (pure JAX) for verification
def dsm_local_attention_ref(x, a, b):
    mean = jnp.mean(x, axis=(2, 3), keepdims=True)
    out = x - mean
    a4 = a.reshape(1, -1, 1, 1)
    b4 = b.reshape(1, -1, 1, 1)
    return a4 * out * x + b4 * x


# ----------------------------------------------------------------------------- main
if __name__ == "__main__":
    B, C, H, W = 2, 4, 16, 16

    key = jax.random.PRNGKey(0)
    kx, ka, kb = jax.random.split(key, 3)
    x = jax.random.normal(kx, (B, C, H, W), jnp.float32)
    # Module default init is a=0, b=1 (identity output); use small random values so the
    # math path is actually exercised.
    a = 0.1 * jax.random.normal(ka, (C, 1, 1), jnp.float32)
    b = 1.0 + 0.1 * jax.random.normal(kb, (C, 1, 1), jnp.float32)

    fwd = jax.jit(dsm_local_attention)
    out = fwd(x, a, b)
    jax.block_until_ready(out)

    assert out.shape == (B, C, H, W), out.shape
    assert bool(jnp.all(jnp.isfinite(out)))

    ref = dsm_local_attention_ref(x, a, b)
    assert bool(jnp.allclose(out, ref, atol=1e-5, rtol=1e-5)), (
        float(jnp.max(jnp.abs(out - ref)))
    )

    print("KERNEL_OK")
</pallas_src>

<mosaic_0001>
module attributes {stable_mosaic.version = 11 : i64} {
  func.func @dsm_local_attention_kernel(%arg0: i32, %arg1: memref<1x4x256xf32, #tpu.memory_space<vmem>>, %arg2: memref<4x1xf32, #tpu.memory_space<vmem>>, %arg3: memref<4x1xf32, #tpu.memory_space<vmem>>, %arg4: memref<1x4x256xf32, #tpu.memory_space<vmem>>) attributes {dimension_semantics = [#tpu.dimension_semantics<parallel>], iteration_bounds = array<i64: 2>, scalar_prefetch = 0 : i64, scratch_operands = 0 : i64, tpu.core_type = #tpu.core_type<tc>, window_params = [{transform_indices = @transform_0, window_bounds = array<i64: 1, 4, 256>}, {pipeline_mode = #tpu.pipeline_mode<synchronous>, transform_indices = @transform_1, window_bounds = array<i64: 4, 1>}, {pipeline_mode = #tpu.pipeline_mode<synchronous>, transform_indices = @transform_2, window_bounds = array<i64: 4, 1>}, {transform_indices = @transform_3, window_bounds = array<i64: 1, 4, 256>}]} {
    %c0 = arith.constant 0 : index
    %c0_0 = arith.constant 0 : index
    %c0_1 = arith.constant 0 : index
    %0 = vector.load %arg1[%c0, %c0_0, %c0_1] : memref<1x4x256xf32, #tpu.memory_space<vmem>>, vector<1x4x256xf32>
    %1 = vector.shape_cast %0 : vector<1x4x256xf32> to vector<4x256xf32>
    %cst = arith.constant dense<0.000000e+00> : vector<4xf32>
    %2 = vector.multi_reduction <add>, %1, %cst [1] : vector<4x256xf32> to vector<4xf32>
    %3 = vector.shape_cast %2 : vector<4xf32> to vector<4x1xf32>
    %cst_2 = arith.constant 2.560000e+02 : f32
    %4 = vector.broadcast %cst_2 : f32 to vector<4x1xf32>
    %5 = arith.divf %3, %4 : vector<4x1xf32>
    %6 = vector.broadcast %5 : vector<4x1xf32> to vector<4x256xf32>
    %7 = arith.subf %1, %6 : vector<4x256xf32>
    %c0_3 = arith.constant 0 : index
    %c0_4 = arith.constant 0 : index
    %8 = vector.load %arg2[%c0_3, %c0_4] : memref<4x1xf32, #tpu.memory_space<vmem>>, vector<4x1xf32>
    %c0_5 = arith.constant 0 : index
    %c0_6 = arith.constant 0 : index
    %9 = vector.load %arg3[%c0_5, %c0_6] : memref<4x1xf32, #tpu.memory_space<vmem>>, vector<4x1xf32>
    %10 = vector.broadcast %8 : vector<4x1xf32> to vector<4x256xf32>
    %11 = arith.mulf %10, %7 : vector<4x256xf32>
    %12 = arith.mulf %11, %1 : vector<4x256xf32>
    %13 = vector.broadcast %9 : vector<4x1xf32> to vector<4x256xf32>
    %14 = arith.mulf %13, %1 : vector<4x256xf32>
    %15 = arith.addf %12, %14 : vector<4x256xf32>
    %c0_7 = arith.constant 0 : index
    %c0_8 = arith.constant 0 : index
    %c0_9 = arith.constant 0 : index
    %16 = vector.load %arg4[%c0_7, %c0_8, %c0_9] : memref<1x4x256xf32, #tpu.memory_space<vmem>>, vector<1x4x256xf32>
    %17 = vector.shape_cast %16 : vector<1x4x256xf32> to vector<4x256xf32>
    %18 = vector.shape_cast %15 : vector<4x256xf32> to vector<1x4x256xf32>
    tpu.vector_store %arg4[%c0_7, %c0_8, %c0_9], %18 {strides = array<i32>} : memref<1x4x256xf32, #tpu.memory_space<vmem>>, vector<1x4x256xf32>,
    return
  }
  func.func @transform_0(%arg0: i32) -> (i32, i32, i32) {
    %c0_i32 = arith.constant 0 : i32
    %c0_i32_0 = arith.constant 0 : i32
    %c0_i32_1 = arith.constant 0 : i32
    return %arg0, %c0_i32, %c0_i32_0 : i32, i32, i32
  }
  func.func @transform_1(%arg0: i32) -> (i32, i32) {
    %c0_i32 = arith.constant 0 : i32
    %c0_i32_0 = arith.constant 0 : i32
    %c0_i32_1 = arith.constant 0 : i32
    return %c0_i32, %c0_i32_0 : i32, i32
  }
  func.func @transform_2(%arg0: i32) -> (i32, i32) {
    %c0_i32 = arith.constant 0 : i32
    %c0_i32_0 = arith.constant 0 : i32
    %c0_i32_1 = arith.constant 0 : i32
    return %c0_i32, %c0_i32_0 : i32, i32
  }
  func.func @transform_3(%arg0: i32) -> (i32, i32, i32) {
    %c0_i32 = arith.constant 0 : i32
    %c0_i32_0 = arith.constant 0 : i32
    %c0_i32_1 = arith.constant 0 : i32
    return %arg0, %c0_i32, %c0_i32_0 : i32, i32, i32
  }
}

</mosaic_0001>

<llo_original>
// kernel: dsm_local_attention.1
$region0: #{dsm_local_attention.1}
  #allocation0 [shape = 'u32[]', space=smem, size = 0x4, offset = 0x4, fixed_abs, tag = 'smem constant byte address 0x4 - core index']
  #allocation1 [shape = 'u32[72,128]{1,0:T(1,128)}', space=vmem, size = 0x9000, scoped, tag = 'internal scratch']
  %s0 = inlined_call_operand.vmem [shape: f32[2,4,256], index: 0, kind: input, shape index: {}]
  %s1 = inlined_call_operand.vmem [shape: f32[4,1], index: 1, kind: input, shape index: {}]
  %s2 = inlined_call_operand.vmem [shape: f32[4,1], index: 2, kind: input, shape index: {}]
  %s3 = inlined_call_operand.vmem [shape: f32[2,4,256], index: 3, kind: output, shape index: {}]
  %s4 = sld [smem:[#allocation0]]
  $region45: #{dsm_local_attention.1} parent=0
    _
  %s6 = ssub.s32 1, %s4
  %s7 = scalar_select 0, %s6, %s4
  loop: start=0, step=1, limit=4
  $region2: #{dsm_local_attention.1} parent=0 // loop_pre_header
    _
  $region3: #{dsm_local_attention.1} parent=0 // loop_header
    %s9 = sphi 0, %s13
    %p10 = scmp.ge.s32.totalorder %s9, 4
    %s19 = sphi 0, %s21
    %s22 = sphi 0, %s19
    %s23 = sphi 0, %s22
    %s39 = sphi 0, %s23
    %s43 = sphi 0, %s43
    %s45 = sphi 0, %s43
    %s46 = sphi 0, %s45
    %s60 = sphi 0, %s46
    %s64 = sphi 0, %s64
    %s66 = sphi 0, %s64
    %s67 = sphi 0, %s66
    %s81 = sphi 0, %s67
    %s87 = sphi 0, %s89
    %s90 = sphi 0, %s87
    %s91 = sphi 0, %s90
    %s107 = sphi 0, %s91
  $region4: #{dsm_local_attention.1} parent=0 // loop_header_branch
    %12 = sbr.rel (%p10) target = $region8
  $region5: #{dsm_local_attention.1} parent=0 // loop_body
    %s14 = ssub.s32 %s9, 1
    %s15 = ssub.s32 %s9, 2
    %s16 = sadd.s32 %s9, 1
    %s17 = ssub.s32 %s9, %s16
    %p18 = scmp.eq.s32.totalorder %s17, 0
    %s20 = sadd.s32 %s19, 1
    %s21 = scalar_select %p18, %s19, %s20
    %p24 = pneg %p18
    %p25 = scmp.eq.s32.totalorder %s9, 1
    %p26 = por %p24, %p25
    %p27 = scmp.ne.s32.totalorder %s19, %s22
    %p28 = scmp.eq.s32.totalorder %s9, 0
    %p29 = por %p27, %p28
    %p30 = scmp.ne.s32.totalorder %s19, %s22
    %p31 = scmp.eq.s32.totalorder %s14, 1
    %p32 = por %p30, %p31
    %p33 = scmp.ne.s32.totalorder %s22, %s23
    %p34 = scmp.eq.s32.totalorder %s14, 0
    %p35 = por %p33, %p34
    %p36 = scmp.ne.s32.totalorder %s22, %s23
    %p37 = scmp.eq.s32.totalorder %s15, 1
    %p38 = por %p36, %p37
    %p40 = scmp.ne.s32.totalorder %s23, %s39
    %p41 = scmp.eq.s32.totalorder %s15, 0
    %p42 = por %p40, %p41
    %s44 = sadd.s32 %s43, 1
    %p47 = scmp.eq.s32.totalorder %s9, 1
    %p48 = scmp.ne.s32.totalorder %s43, %s45
    %p49 = scmp.eq.s32.totalorder %s9, 0
    %p50 = por %p48, %p49
    %p51 = scmp.ne.s32.totalorder %s43, %s45
    %p52 = scmp.eq.s32.totalorder %s14, 1
    %p53 = por %p51, %p52
    %p54 = scmp.ne.s32.totalorder %s45, %s46
    %p55 = scmp.eq.s32.totalorder %s14, 0
    %p56 = por %p54, %p55
    %p57 = scmp.ne.s32.totalorder %s45, %s46
    %p58 = scmp.eq.s32.totalorder %s15, 1
    %p59 = por %p57, %p58
    %p61 = scmp.ne.s32.totalorder %s46, %s60
    %p62 = scmp.eq.s32.totalorder %s15, 0
    %p63 = por %p61, %p62
    %s65 = sadd.s32 %s64, 1
    %p68 = scmp.eq.s32.totalorder %s9, 1
    %p69 = scmp.ne.s32.totalorder %s64, %s66
    %p70 = scmp.eq.s32.totalorder %s9, 0
    %p71 = por %p69, %p70
    %p72 = scmp.ne.s32.totalorder %s64, %s66
    %p73 = scmp.eq.s32.totalorder %s14, 1
    %p74 = por %p72, %p73
    %p75 = scmp.ne.s32.totalorder %s66, %s67
    %p76 = scmp.eq.s32.totalorder %s14, 0
    %p77 = por %p75, %p76
    %p78 = scmp.ne.s32.totalorder %s66, %s67
    %p79 = scmp.eq.s32.totalorder %s15, 1
    %p80 = por %p78, %p79
    %p82 = scmp.ne.s32.totalorder %s67, %s81
    %p83 = scmp.eq.s32.totalorder %s15, 0
    %p84 = por %p82, %p83
    %s85 = ssub.s32 %s9, %s16
    %p86 = scmp.eq.s32.totalorder %s85, 0
    %s88 = sadd.s32 %s87, 1
    %s89 = scalar_select %p86, %s87, %s88
    %p92 = pneg %p86
    %p93 = scmp.eq.s32.totalorder %s9, 1
    %p94 = por %p92, %p93
    %p95 = scmp.ne.s32.totalorder %s87, %s90
    %p96 = scmp.eq.s32.totalorder %s9, 0
    %p97 = por %p95, %p96
    %p98 = scmp.ne.s32.totalorder %s87, %s90
    %p99 = scmp.eq.s32.totalorder %s14, 1
    %p100 = por %p98, %p99
    %p101 = scmp.ne.s32.totalorder %s90, %s91
    %p102 = scmp.eq.s32.totalorder %s14, 0
    %p103 = por %p101, %p102
    %p104 = scmp.ne.s32.totalorder %s90, %s91
    %p105 = scmp.eq.s32.totalorder %s15, 1
    %p106 = por %p104, %p105
    %p108 = scmp.ne.s32.totalorder %s91, %s107
    %p109 = scmp.eq.s32.totalorder %s15, 0
    %p110 = por %p108, %p109
    %p111 = scmp.le.s32.totalorder 1, %s9
    %p112 = scmp.lt.s32.totalorder %s9, 3
    %p113 = pnand %p111, %p112
    %p114 = pneg %p113
    // Predicated region
    $region9: #{dsm_local_attention.1} parent=5 // pred_check
      _
    $region10: #{dsm_local_attention.1} parent=5 // pred_check_branch
      %116 = sbr.rel (%p113) target = $region12
    $region11: #{dsm_local_attention.1} parent=5 // pred_region
      %s117 = ssub.s32 %s9, 1
      // Predicated region
      $region13: #{dsm_local_attention.1} parent=11 // pred_check
        %p118 = pneg %p56
      $region14: #{dsm_local_attention.1} parent=11 // pred_check_branch
        %120 = sbr.rel (%p118) target = $region16
      $region15: #{dsm_local_attention.1} parent=11 // pred_region
        _
      $region16: #{dsm_local_attention.1} parent=11 // pred_fallthru
        _
      // Predicated region
      $region17: #{dsm_local_attention.1} parent=11 // pred_check
        %p121 = pneg %p77
      $region18: #{dsm_local_attention.1} parent=11 // pred_check_branch
        %123 = sbr.rel (%p121) target = $region20
      $region19: #{dsm_local_attention.1} parent=11 // pred_region
        _
      $region20: #{dsm_local_attention.1} parent=11 // pred_fallthru
        _
    $region12: #{dsm_local_attention.1} parent=5 // pred_fallthru
      _
    %p124 = scmp.lt.s32.totalorder %s9, 2
    // Predicated region
    $region21: #{dsm_local_attention.1} parent=5 // pred_check
      %p125 = pneg %p124
    $region22: #{dsm_local_attention.1} parent=5 // pred_check_branch
      %127 = sbr.rel (%p125) target = $region24
    $region23: #{dsm_local_attention.1} parent=5 // pred_region
      // Predicated region
      $region25: #{dsm_local_attention.1} parent=23 // pred_check
        %p128 = pneg %p29
      $region26: #{dsm_local_attention.1} parent=23 // pred_check_branch
        %130 = sbr.rel (%p128) target = $region28
      $region27: #{dsm_local_attention.1} parent=23 // pred_region
        %p131 = scmp.lt.s32.totalorder %s9, 1
        %s132 = scalar_select %p131, %s9, 1
        %s133 = smul.addr %s132, 2
        %s134 = smul.addr %s133, 4
        %s135 = scalar_lea.vmem %s0, %s134
      $region28: #{dsm_local_attention.1} parent=23 // pred_fallthru
        _
    $region24: #{dsm_local_attention.1} parent=5 // pred_fallthru
      _
    %p136 = scmp.le.s32.totalorder 1, %s9
    %p137 = scmp.lt.s32.totalorder %s9, 3
    %p138 = pnand %p136, %p137
    %p139 = pneg %p138
    // Predicated region
    $region29: #{dsm_local_attention.1} parent=5 // pred_check
      _
    $region30: #{dsm_local_attention.1} parent=5 // pred_check_branch
      %141 = sbr.rel (%p138) target = $region32
    $region31: #{dsm_local_attention.1} parent=5 // pred_region
      %s142 = ssub.s32 %s9, 1
      %p143 = scmp.lt.s32.totalorder %s14, 1
      %s144 = scalar_select %p143, %s14, 1
      %s145 = smul.addr %s144, 2
      %s146 = smul.addr %s145, 4
      %s147 = scalar_lea.vmem %s0, %s146
      %p148 = pneg %p35
      %p149 = pneg %p32
      %p150 = pneg %p56
      %p151 = pneg %p53
      %p152 = pneg %p77
      %p153 = pneg %p74
      %p154 = pneg %p103
      %p155 = pneg %p100
      %p156 = scmp.lt.s32.totalorder %s14, 1
      %s157 = scalar_select %p156, %s14, 1
      %s158 = smul.addr %s157, 2
      %s159 = smul.addr %s158, 4
      %s160 = scalar_lea.vmem %s3, %s159
      %p161 = scmp.lt.s32.totalorder %s14, 1
      %s162 = scalar_select %p161, %s14, 1
      %s163 = smul.addr %s162, 2
      %s164 = smul.addr %s163, 4
      %s165 = scalar_lea.vmem %s0, %s164
      %p166 = scmp.lt.s32.totalorder %s14, 1
      %s167 = scalar_select %p166, %s14, 1
      %s168 = smul.addr %s167, 2
      %s169 = smul.addr %s168, 4
      %s170 = scalar_lea.vmem %s3, %s169
      %v171 = vld [vmem:[%s165] sm:$0xff]
      %173 = vst [vmem:[#allocation1] ss:$2 sm:$0xff] %v171
      %v174 = vld.sshfl [vmem:[#allocation1] sm:$0xff pattern:$0x75316420]
      %v175 = vld.sshfl [vmem:[#allocation1 + $0x8] sm:$0xff pattern:$0x75316420]
      %vm178 = vcmask 1043456
      %v179 = vsel %vm178, %v174, 0.0
      %v180 = vsel %vm178, %v175, 0.0
      %v181 = vadd.f32 %v179, %v180
      %182 = vadd.xlane.f32.xlu0 %v181
      %v183 = vpop.xlane.xlu0 %182
      %v184 = vrcp.pop 256.0
      %v185 = vmul.f32 256.0, %v184
      %v186 = vsub.f32 1.0, %v185
      %v187 = vmul.f32 %v184, %v186
      %v188 = vadd.f32 %v184, %v187
      %vm189 = vweird.f32 %v184
      %v190 = vsel %vm189, %v184, %v188
      %v191 = vmul.f32 %v183, %v190
      %v194 = vunpack.c.l.s4 839922192
      %v195 = vunpack.c.0.s8 %v194
      %v196 = vperm.slane %v191, %v195
      %v198 = vsub.f32 %v171, %v196
      %v199 = vld [vmem:[%s1] sm:$0xf]
      %v200 = vld [vmem:[%s2] sm:$0xf]
      %202 = vset.pattern.permute.xlu0 0
      %203 = vperm.xlu0 %202, %v199
      %v204 = vpop.permute.xlu0 %203
      %207 = vst [vmem:[#allocation1] ss:$2 sm:$0xff] %v198
      %v208 = vld.sshfl [vmem:[#allocation1] sm:$0xff pattern:$0x75316420]
      %v209 = vld.sshfl [vmem:[#allocation1 + $0x8] sm:$0xff pattern:$0x75316420]
      %v212 = vmul.f32 %v204, %v208
      %v213 = vmul.f32 %v204, %v209
      %214 = vst [vmem:[#allocation1] ss:$2 sm:$0xff] %v171
      %v215 = vld.sshfl [vmem:[#allocation1] sm:$0xff pattern:$0x75316420]
      %v216 = vld.sshfl [vmem:[#allocation1 + $0x8] sm:$0xff pattern:$0x75316420]
      %v219 = vmul.f32 %v212, %v215
      %v220 = vmul.f32 %v213, %v216
      %222 = vset.pattern.permute.xlu0 0
      %223 = vperm.xlu0 %222, %v200
      %v224 = vpop.permute.xlu0 %223
      %226 = vst [vmem:[#allocation1] ss:$2 sm:$0xff] %v171
      %v227 = vld.sshfl [vmem:[#allocation1] sm:$0xff pattern:$0x75316420]
      %v228 = vld.sshfl [vmem:[#allocation1 + $0x8] sm:$0xff pattern:$0x75316420]
      %v231 = vmul.f32 %v224, %v227
      %v232 = vmul.f32 %v224, %v228
      %v233 = vadd.f32 %v219, %v231
      %v234 = vadd.f32 %v220, %v232
      %v237 = vrot.slane %v234, 4
      %v238 = vsel %vm178, %v233, %v237
      %240 = vst [vmem:[%s170] sm:$0xff] %v238
      %p241 = scmp.lt.s32.totalorder %s14, 1
      %s242 = scalar_select %p241, %s14, 1
      %s243 = smul.addr %s242, 2
      %s244 = smul.addr %s243, 4
      %s245 = scalar_lea.vmem %s3, %s244
      // Predicated region
      $region33: #{dsm_local_attention.1} parent=31 // pred_check
        %p246 = pneg %p100
      $region34: #{dsm_local_attention.1} parent=31 // pred_check_branch
        %248 = sbr.rel (%p246) target = $region36
      $region35: #{dsm_local_attention.1} parent=31 // pred_region
        _
      $region36: #{dsm_local_attention.1} parent=31 // pred_fallthru
        _
    $region32: #{dsm_local_attention.1} parent=5 // pred_fallthru
      _
    %p249 = scmp.le.s32.totalorder 2, %s9
    // Predicated region
    $region37: #{dsm_local_attention.1} parent=5 // pred_check
      %p250 = pneg %p249
    $region38: #{dsm_local_attention.1} parent=5 // pred_check_branch
      %252 = sbr.rel (%p250) target = $region40
    $region39: #{dsm_local_attention.1} parent=5 // pred_region
      %s253 = ssub.s32 %s9, 2
      // Predicated region
      $region41: #{dsm_local_attention.1} parent=39 // pred_check
        %p254 = pneg %p106
      $region42: #{dsm_local_attention.1} parent=39 // pred_check_branch
        %256 = sbr.rel (%p254) target = $region44
      $region43: #{dsm_local_attention.1} parent=39 // pred_region
        %p257 = scmp.lt.s32.totalorder %s15, 1
        %s258 = scalar_select %p257, %s15, 1
        %s259 = smul.addr %s258, 2
        %s260 = smul.addr %s259, 4
        %s261 = scalar_lea.vmem %s3, %s260
      $region44: #{dsm_local_attention.1} parent=39 // pred_fallthru
        _
    $region40: #{dsm_local_attention.1} parent=5 // pred_fallthru
      _
  $region6: #{dsm_local_attention.1} parent=0 // loop_footer
    %s13 = sadd.s32 1, %s9
  $region7: #{dsm_local_attention.1} parent=0 // loop_footer_branch
    %8 = sbr.rel target = $region3
  $region8: #{dsm_local_attention.1} parent=0 // loop_exit
    _

</llo_original>
